<compile_context>
chip_gen: v6e
topology: v6e:2x2x1
jax: 0.10.0
libtpu: 0.0.40
codegen_flags: <defaults>
</compile_context>

<pallas_src>
import math

import jax
import jax.numpy as jnp
from jax.experimental import pallas as pl
from jax.experimental.pallas import tpu as pltpu


def _alexnet_reshape_kernel(x_ref, gmap_ref, gmap_t_ref, out_ref):
    """x_ref/out_ref: (bb, 1, N); gmap_ref: (N, G); gmap_t_ref: (G, N)."""
    x = x_ref[:, 0, :] - 2.0                                    # (bb, N)

    # ---- softmax over the original last axis: groups of W contiguous lanes.
    # The per-row max is constant within every group, so it is an exact,
    # overflow-safe stabilizer for the grouped softmax.
    row_max = jnp.max(x, axis=-1, keepdims=True)                # (bb, 1)
    e = jnp.exp(x - row_max)                                    # (bb, N)
    group_sum = jnp.dot(e, gmap_ref[...],
                        preferred_element_type=jnp.float32)     # (bb, G)
    denom = jnp.dot(group_sum, gmap_t_ref[...],
                    preferred_element_type=jnp.float32)         # (bb, N)
    s1 = e / denom                                              # first softmax

    # ---- reshape is free (rows already flat); +2; softmax over the full row.
    y = s1 + 2.0
    m2 = jnp.max(y, axis=-1, keepdims=True)
    e2 = jnp.exp(y - m2)
    out = e2 / jnp.sum(e2, axis=-1, keepdims=True)

    out_ref[:, 0, :] = out.astype(out_ref.dtype)


def alexnet_reshape_forward(activation, newshape):
    oldshape = activation.shape
    B = oldshape[0]
    W = oldshape[-1]                      # axis of the first softmax
    N = math.prod(oldshape[1:])           # flattened per-batch row length
    G = N // W                            # number of softmax groups per row

    # TODO(synk): generalize to newshapes other than the AlexNet per-batch
    # flatten, and to very large N (the O(N*G) indicator matrices would then
    # be replaced by an in-kernel grouped reduction).
    assert tuple(newshape) == (B, N), "kernel implements the AlexNet flatten reshape"
    assert N % W == 0 and N % 128 == 0, "flattened row must be lane-aligned"

    # Lane-dense view; middle singleton keeps the block's last two dims equal
    # to the full array dims (strictly legal blocking for any batch tile size).
    x = activation.reshape(B, 1, N)

    # 0/1 group-indicator matrices (computed once, fetched once by the kernel).
    gids = jnp.arange(N, dtype=jnp.int32) // W
    gmap = (gids[:, None] == jnp.arange(G, dtype=jnp.int32)[None, :]).astype(jnp.float32)
    gmap_t = gmap.T

    # ---- tile sizing: pack batch rows per step up to ~2 MiB, but keep >= 2
    # grid steps when possible so v7x can shard the parallel axis over 2 TCs.
    row_bytes = 2 * N * 4                 # in + out per batch row (f32)
    bb = max(1, min(B, (2 * 1024 * 1024) // row_bytes))
    while bb > 1 and B // bb < 2:
        bb -= 1
    while B % bb != 0:
        bb -= 1
    grid = (B // bb,)

    # VMEM footprint: double-buffered x/out tiles (sublane-padded to 8) + masks.
    tile_bytes = 2 * (2 * bb * 8 * N * 4) + 2 * (2 * N * G * 4)
    vmem_limit = None
    if tile_bytes > 16 * 1024 * 1024:     # above v5e's default scoped limit
        vmem_limit = min(int(tile_bytes * 3 // 2), 48 * 1024 * 1024)  # < v7x 64 MiB

    cost = pl.CostEstimate(
        flops=4 * B * N * G + 10 * B * N,
        transcendentals=2 * B * N,
        bytes_accessed=2 * B * N * 4 + 2 * N * G * 4,
    )

    out = pl.pallas_call(
        _alexnet_reshape_kernel,
        out_shape=jax.ShapeDtypeStruct((B, 1, N), activation.dtype),
        grid_spec=pl.GridSpec(
            grid=grid,
            in_specs=[
                pl.BlockSpec((bb, 1, N), lambda b: (b, 0, 0)),
                pl.BlockSpec((N, G), lambda b: (0, 0)),   # constant block: DMA'd once
                pl.BlockSpec((G, N), lambda b: (0, 0)),
            ],
            out_specs=pl.BlockSpec((bb, 1, N), lambda b: (b, 0, 0)),
        ),
        compiler_params=pltpu.CompilerParams(
            dimension_semantics=("parallel",),
            vmem_limit_bytes=vmem_limit,
        ),
        cost_estimate=cost,
    )(x, gmap, gmap_t)

    return out.reshape(newshape)


if __name__ == "__main__":
    key = jax.random.PRNGKey(0)
    B, C, H, W = 2, 4, 16, 16
    oldshape = (B, C, H, W)
    newshape = (B, C * H * W)

    activation = jax.random.normal(key, oldshape, dtype=jnp.float32)

    out = alexnet_reshape_forward(activation, newshape)
    out = jax.block_until_ready(out)

    # Pure-JAX reference (same semantics as the PyTorch module's forward).
    ref1 = jax.nn.softmax(activation - 2.0, axis=-1)
    ref = jax.nn.softmax(ref1.reshape(newshape) + 2.0, axis=-1)

    assert out.shape == tuple(newshape)
    assert jnp.allclose(out, ref, atol=1e-5, rtol=1e-5), "mismatch vs reference"
    print("KERNEL_OK")
</pallas_src>

<mosaic_0001>
module attributes {stable_mosaic.version = 11 : i64} {
  func.func @_alexnet_reshape_kernel(%arg0: i32, %arg1: memref<1x1x1024xf32, #tpu.memory_space<vmem>>, %arg2: memref<1024x64xf32, #tpu.memory_space<vmem>>, %arg3: memref<64x1024xf32, #tpu.memory_space<vmem>>, %arg4: memref<1x1x1024xf32, #tpu.memory_space<vmem>>) attributes {dimension_semantics = [#tpu.dimension_semantics<parallel>], iteration_bounds = array<i64: 2>, scalar_prefetch = 0 : i64, scratch_operands = 0 : i64, tpu.core_type = #tpu.core_type<tc>, window_params = [{transform_indices = @transform_0, window_bounds = array<i64: 1, 1, 1024>}, {pipeline_mode = #tpu.pipeline_mode<synchronous>, transform_indices = @transform_1, window_bounds = array<i64: 1024, 64>}, {pipeline_mode = #tpu.pipeline_mode<synchronous>, transform_indices = @transform_2, window_bounds = array<i64: 64, 1024>}, {transform_indices = @transform_3, window_bounds = array<i64: 1, 1, 1024>}]} {
    %c0 = arith.constant 0 : index
    %c0_0 = arith.constant 0 : index
    %c0_1 = arith.constant 0 : index
    %0 = vector.load %arg1[%c0, %c0_0, %c0_1] : memref<1x1x1024xf32, #tpu.memory_space<vmem>>, vector<1x1x1024xf32>
    %1 = vector.shape_cast %0 : vector<1x1x1024xf32> to vector<1x1024xf32>
    %cst = arith.constant 2.000000e+00 : f32
    %2 = vector.broadcast %cst : f32 to vector<1x1024xf32>
    %3 = arith.subf %1, %2 : vector<1x1024xf32>
    %cst_2 = arith.constant dense<0xFF800000> : vector<1xf32>
    %4 = vector.multi_reduction <maximumf>, %3, %cst_2 [1] : vector<1x1024xf32> to vector<1xf32>
    %5 = vector.shape_cast %4 : vector<1xf32> to vector<1x1xf32>
    %6 = vector.broadcast %5 : vector<1x1xf32> to vector<1x1024xf32>
    %7 = arith.subf %3, %6 : vector<1x1024xf32>
    %8 = math.exp %7 : vector<1x1024xf32>
    %c0_3 = arith.constant 0 : index
    %c0_4 = arith.constant 0 : index
    %9 = vector.load %arg2[%c0_3, %c0_4] : memref<1024x64xf32, #tpu.memory_space<vmem>>, vector<1024x64xf32>
    %cst_5 = arith.constant dense<0.000000e+00> : vector<1x64xf32>
    %10 = tpu.matmul %8, %9, %cst_5 {dimension_numbers = #tpu.dot_dimension_numbers<[1], [0], [0], [1], [0, 0, 1, 1], [], []>} : vector<1x1024xf32>, vector<1024x64xf32>, vector<1x64xf32> -> vector<1x64xf32>
    %c0_6 = arith.constant 0 : index
    %c0_7 = arith.constant 0 : index
    %11 = vector.load %arg3[%c0_6, %c0_7] : memref<64x1024xf32, #tpu.memory_space<vmem>>, vector<64x1024xf32>
    %cst_8 = arith.constant dense<0.000000e+00> : vector<1x1024xf32>
    %12 = tpu.matmul %10, %11, %cst_8 {dimension_numbers = #tpu.dot_dimension_numbers<[1], [0], [0], [1], [0, 0, 1, 1], [], []>} : vector<1x64xf32>, vector<64x1024xf32>, vector<1x1024xf32> -> vector<1x1024xf32>
    %13 = arith.divf %8, %12 : vector<1x1024xf32>
    %cst_9 = arith.constant 2.000000e+00 : f32
    %14 = vector.broadcast %cst_9 : f32 to vector<1x1024xf32>
    %15 = arith.addf %13, %14 : vector<1x1024xf32>
    %cst_10 = arith.constant dense<0xFF800000> : vector<1xf32>
    %16 = vector.multi_reduction <maximumf>, %15, %cst_10 [1] : vector<1x1024xf32> to vector<1xf32>
    %17 = vector.shape_cast %16 : vector<1xf32> to vector<1x1xf32>
    %18 = vector.broadcast %17 : vector<1x1xf32> to vector<1x1024xf32>
    %19 = arith.subf %15, %18 : vector<1x1024xf32>
    %20 = math.exp %19 : vector<1x1024xf32>
    %cst_11 = arith.constant dense<0.000000e+00> : vector<1xf32>
    %21 = vector.multi_reduction <add>, %20, %cst_11 [1] : vector<1x1024xf32> to vector<1xf32>
    %22 = vector.shape_cast %21 : vector<1xf32> to vector<1x1xf32>
    %23 = vector.broadcast %22 : vector<1x1xf32> to vector<1x1024xf32>
    %24 = arith.divf %20, %23 : vector<1x1024xf32>
    %c0_12 = arith.constant 0 : index
    %c0_13 = arith.constant 0 : index
    %c0_14 = arith.constant 0 : index
    %25 = vector.load %arg4[%c0_12, %c0_13, %c0_14] : memref<1x1x1024xf32, #tpu.memory_space<vmem>>, vector<1x1x1024xf32>
    %26 = vector.shape_cast %25 : vector<1x1x1024xf32> to vector<1x1024xf32>
    %27 = vector.shape_cast %24 : vector<1x1024xf32> to vector<1x1x1024xf32>
    tpu.vector_store %arg4[%c0_12, %c0_13, %c0_14], %27 {strides = array<i32>} : memref<1x1x1024xf32, #tpu.memory_space<vmem>>, vector<1x1x1024xf32>,
    return
  }
  func.func @transform_0(%arg0: i32) -> (i32, i32, i32) {
    %c0_i32 = arith.constant 0 : i32
    %c0_i32_0 = arith.constant 0 : i32
    %c0_i32_1 = arith.constant 0 : i32
    return %arg0, %c0_i32, %c0_i32_0 : i32, i32, i32
  }
  func.func @transform_1(%arg0: i32) -> (i32, i32) {
    %c0_i32 = arith.constant 0 : i32
    %c0_i32_0 = arith.constant 0 : i32
    %c0_i32_1 = arith.constant 0 : i32
    return %c0_i32, %c0_i32_0 : i32, i32
  }
  func.func @transform_2(%arg0: i32) -> (i32, i32) {
    %c0_i32 = arith.constant 0 : i32
    %c0_i32_0 = arith.constant 0 : i32
    %c0_i32_1 = arith.constant 0 : i32
    return %c0_i32, %c0_i32_0 : i32, i32
  }
  func.func @transform_3(%arg0: i32) -> (i32, i32, i32) {
    %c0_i32 = arith.constant 0 : i32
    %c0_i32_0 = arith.constant 0 : i32
    %c0_i32_1 = arith.constant 0 : i32
    return %arg0, %c0_i32, %c0_i32_0 : i32, i32, i32
  }
}

</mosaic_0001>

<llo_original>
// kernel: tpu_custom_call.1
$region0: #{tpu_custom_call.1}
  #allocation0 [shape = 'u32[]', space=smem, size = 0x4, offset = 0x4, fixed_abs, tag = 'smem constant byte address 0x4 - core index']
  #allocation1 [shape = 'u32[144,128]{1,0:T(1,128)}', space=vmem, size = 0x12000, scoped, tag = 'internal scratch']
  %s0 = inlined_call_operand.vmem [shape: f32[2,1,1024], index: 0, kind: input, shape index: {}]
  %s1 = inlined_call_operand.vmem [shape: f32[1024,64], index: 1, kind: input, shape index: {}]
  %s2 = inlined_call_operand.vmem [shape: f32[64,1024], index: 2, kind: input, shape index: {}]
  %s3 = inlined_call_operand.hbm [shape: f32[2,1,1024], index: 3, kind: output, shape index: {}]
  %s4 = sld [smem:[#allocation0]]
  $region45: #{tpu_custom_call.1} parent=0
    _
  %s6 = ssub.s32 1, %s4
  %s7 = scalar_select 0, %s6, %s4
  $region1: #{tpu_custom_call.1} parent=0
    #allocation2 [shape = 'u8[8192]{0}', space=vmem, size = 0x2000, scoped, tag = 'output window, operand 0']
    #allocation3 [shape = 's32[2]{0}', space=sflag, size = 0x8, scoped, tag = 'scoped memory for tpu_custom_call.1']
    %8 = vsyncpa [#allocation3], 0
    %s9 = scalar_lea.sflag [#allocation3], 1
    %10 = vsyncpa %s9, 0
    loop: start=0, step=1, limit=4
    $region2: #{tpu_custom_call.1} parent=1 // loop_pre_header
      _
    $region3: #{tpu_custom_call.1} parent=1 // loop_header
      %s12 = sphi 0, %s16
      %p13 = scmp.ge.s32.totalorder %s12, 4
      %s22 = sphi 0, %s24
      %s25 = sphi 0, %s22
      %s26 = sphi 0, %s25
      %s42 = sphi 0, %s26
      %s46 = sphi 0, %s46
      %s48 = sphi 0, %s46
      %s49 = sphi 0, %s48
      %s63 = sphi 0, %s49
      %s67 = sphi 0, %s67
      %s69 = sphi 0, %s67
      %s70 = sphi 0, %s69
      %s84 = sphi 0, %s70
      %s90 = sphi 0, %s92
      %s93 = sphi 0, %s90
      %s94 = sphi 0, %s93
      %s110 = sphi 0, %s94
    $region4: #{tpu_custom_call.1} parent=1 // loop_header_branch
      %15 = sbr.rel (%p13) target = $region8
    $region5: #{tpu_custom_call.1} parent=1 // loop_body
      %s17 = ssub.s32 %s12, 1
      %s18 = ssub.s32 %s12, 2
      %s19 = sadd.s32 %s12, 1
      %s20 = ssub.s32 %s12, %s19
      %p21 = scmp.eq.s32.totalorder %s20, 0
      %s23 = sadd.s32 %s22, 1
      %s24 = scalar_select %p21, %s22, %s23
      %p27 = pneg %p21
      %p28 = scmp.eq.s32.totalorder %s12, 1
      %p29 = por %p27, %p28
      %p30 = scmp.ne.s32.totalorder %s22, %s25
      %p31 = scmp.eq.s32.totalorder %s12, 0
      %p32 = por %p30, %p31
      %p33 = scmp.ne.s32.totalorder %s22, %s25
      %p34 = scmp.eq.s32.totalorder %s17, 1
      %p35 = por %p33, %p34
      %p36 = scmp.ne.s32.totalorder %s25, %s26
      %p37 = scmp.eq.s32.totalorder %s17, 0
      %p38 = por %p36, %p37
      %p39 = scmp.ne.s32.totalorder %s25, %s26
      %p40 = scmp.eq.s32.totalorder %s18, 1
      %p41 = por %p39, %p40
      %p43 = scmp.ne.s32.totalorder %s26, %s42
      %p44 = scmp.eq.s32.totalorder %s18, 0
      %p45 = por %p43, %p44
      %s47 = sadd.s32 %s46, 1
      %p50 = scmp.eq.s32.totalorder %s12, 1
      %p51 = scmp.ne.s32.totalorder %s46, %s48
      %p52 = scmp.eq.s32.totalorder %s12, 0
      %p53 = por %p51, %p52
      %p54 = scmp.ne.s32.totalorder %s46, %s48
      %p55 = scmp.eq.s32.totalorder %s17, 1
      %p56 = por %p54, %p55
      %p57 = scmp.ne.s32.totalorder %s48, %s49
      %p58 = scmp.eq.s32.totalorder %s17, 0
      %p59 = por %p57, %p58
      %p60 = scmp.ne.s32.totalorder %s48, %s49
      %p61 = scmp.eq.s32.totalorder %s18, 1
      %p62 = por %p60, %p61
      %p64 = scmp.ne.s32.totalorder %s49, %s63
      %p65 = scmp.eq.s32.totalorder %s18, 0
      %p66 = por %p64, %p65
      %s68 = sadd.s32 %s67, 1
      %p71 = scmp.eq.s32.totalorder %s12, 1
      %p72 = scmp.ne.s32.totalorder %s67, %s69
      %p73 = scmp.eq.s32.totalorder %s12, 0
      %p74 = por %p72, %p73
      %p75 = scmp.ne.s32.totalorder %s67, %s69
      %p76 = scmp.eq.s32.totalorder %s17, 1
      %p77 = por %p75, %p76
      %p78 = scmp.ne.s32.totalorder %s69, %s70
      %p79 = scmp.eq.s32.totalorder %s17, 0
      %p80 = por %p78, %p79
      %p81 = scmp.ne.s32.totalorder %s69, %s70
      %p82 = scmp.eq.s32.totalorder %s18, 1
      %p83 = por %p81, %p82
      %p85 = scmp.ne.s32.totalorder %s70, %s84
      %p86 = scmp.eq.s32.totalorder %s18, 0
      %p87 = por %p85, %p86
      %s88 = ssub.s32 %s12, %s19
      %p89 = scmp.eq.s32.totalorder %s88, 0
      %s91 = sadd.s32 %s90, 1
      %s92 = scalar_select %p89, %s90, %s91
      %p95 = pneg %p89
      %p96 = scmp.eq.s32.totalorder %s12, 1
      %p97 = por %p95, %p96
      %p98 = scmp.ne.s32.totalorder %s90, %s93
      %p99 = scmp.eq.s32.totalorder %s12, 0
      %p100 = por %p98, %p99
      %p101 = scmp.ne.s32.totalorder %s90, %s93
      %p102 = scmp.eq.s32.totalorder %s17, 1
      %p103 = por %p101, %p102
      %p104 = scmp.ne.s32.totalorder %s93, %s94
      %p105 = scmp.eq.s32.totalorder %s17, 0
      %p106 = por %p104, %p105
      %p107 = scmp.ne.s32.totalorder %s93, %s94
      %p108 = scmp.eq.s32.totalorder %s18, 1
      %p109 = por %p107, %p108
      %p111 = scmp.ne.s32.totalorder %s94, %s110
      %p112 = scmp.eq.s32.totalorder %s18, 0
      %p113 = por %p111, %p112
      %p114 = scmp.le.s32.totalorder 1, %s12
      %p115 = scmp.lt.s32.totalorder %s12, 3
      %p116 = pnand %p114, %p115
      %p117 = pneg %p116
      // Predicated region
      $region9: #{tpu_custom_call.1} parent=5 // pred_check
        _
      $region10: #{tpu_custom_call.1} parent=5 // pred_check_branch
        %119 = sbr.rel (%p116) target = $region12
      $region11: #{tpu_custom_call.1} parent=5 // pred_region
        %s120 = ssub.s32 %s12, 1
        // Predicated region
        $region13: #{tpu_custom_call.1} parent=11 // pred_check
          %p121 = pneg %p59
        $region14: #{tpu_custom_call.1} parent=11 // pred_check_branch
          %123 = sbr.rel (%p121) target = $region16
        $region15: #{tpu_custom_call.1} parent=11 // pred_region
          _
        $region16: #{tpu_custom_call.1} parent=11 // pred_fallthru
          _
        // Predicated region
        $region17: #{tpu_custom_call.1} parent=11 // pred_check
          %p124 = pneg %p80
        $region18: #{tpu_custom_call.1} parent=11 // pred_check_branch
          %126 = sbr.rel (%p124) target = $region20
        $region19: #{tpu_custom_call.1} parent=11 // pred_region
          _
        $region20: #{tpu_custom_call.1} parent=11 // pred_fallthru
          _
      $region12: #{tpu_custom_call.1} parent=5 // pred_fallthru
        _
      %p127 = scmp.lt.s32.totalorder %s12, 2
      // Predicated region
      $region21: #{tpu_custom_call.1} parent=5 // pred_check
        %p128 = pneg %p127
      $region22: #{tpu_custom_call.1} parent=5 // pred_check_branch
        %130 = sbr.rel (%p128) target = $region24
      $region23: #{tpu_custom_call.1} parent=5 // pred_region
        // Predicated region
        $region25: #{tpu_custom_call.1} parent=23 // pred_check
          %p131 = pneg %p32
        $region26: #{tpu_custom_call.1} parent=23 // pred_check_branch
          %133 = sbr.rel (%p131) target = $region28
        $region27: #{tpu_custom_call.1} parent=23 // pred_region
          %p134 = scmp.lt.s32.totalorder %s12, 1
          %s135 = scalar_select %p134, %s12, 1
          %s136 = smul.addr %s135, 8
          %s137 = scalar_lea.vmem %s0, %s136
        $region28: #{tpu_custom_call.1} parent=23 // pred_fallthru
          _
      $region24: #{tpu_custom_call.1} parent=5 // pred_fallthru
        _
      %p138 = scmp.le.s32.totalorder 1, %s12
      %p139 = scmp.lt.s32.totalorder %s12, 3
      %p140 = pnand %p138, %p139
      %p141 = pneg %p140
      // Predicated region
      $region29: #{tpu_custom_call.1} parent=5 // pred_check
        _
      $region30: #{tpu_custom_call.1} parent=5 // pred_check_branch
        %143 = sbr.rel (%p140) target = $region32
      $region31: #{tpu_custom_call.1} parent=5 // pred_region
        %s144 = ssub.s32 %s12, 1
        %p145 = scmp.lt.s32.totalorder %s17, 1
        %s146 = scalar_select %p145, %s17, 1
        %s147 = smul.addr %s146, 8
        %s148 = scalar_lea.vmem %s0, %s147
        %p149 = pneg %p38
        %p150 = pneg %p35
        %p151 = pneg %p59
        %p152 = pneg %p56
        %p153 = pneg %p80
        %p154 = pneg %p77
        %p155 = pneg %p106
        %p156 = pneg %p103
        %s157 = sand.u32 %s93, 1
        %s158 = scalar_lea.sflag [#allocation3], %s157
        %s159 = sand.u32 %s93, 1
        %s160 = smul.addr %s159, 8
        %s161 = scalar_lea.vmem [#allocation2], %s160
        %p162 = scmp.lt.s32.totalorder %s17, 1
        %s163 = scalar_select %p162, %s17, 1
        %s164 = smul.addr %s163, 8
        %s165 = scalar_lea.vmem %s0, %s164
        %v166 = vld [vmem:[%s165] sm:$0xff]
        %v167 = vsub.f32 %v166, 2.0
        %v169 = vlaneseq
        %v170 = vshrl.u32 %v169, 7
        %v171 = vsub.s32 0, %v170
        %v172 = vrot.slane %v167, %v171
        %v173 = vlaneseq
        %v174 = vshrl.u32 %v173, 7
        %v175 = vsub.s32 1, %v174
        %v176 = vrot.slane %v167, %v175
        %v177 = vlaneseq
        %v178 = vshrl.u32 %v177, 7
        %v179 = vsub.s32 2, %v178
        %v180 = vrot.slane %v167, %v179
        %v181 = vlaneseq
        %v182 = vshrl.u32 %v181, 7
        %v183 = vsub.s32 3, %v182
        %v184 = vrot.slane %v167, %v183
        %v185 = vlaneseq
        %v186 = vshrl.u32 %v185, 7
        %v187 = vsub.s32 4, %v186
        %v188 = vrot.slane %v167, %v187
        %v189 = vlaneseq
        %v190 = vshrl.u32 %v189, 7
        %v191 = vsub.s32 5, %v190
        %v192 = vrot.slane %v167, %v191
        %v193 = vlaneseq
        %v194 = vshrl.u32 %v193, 7
        %v195 = vsub.s32 6, %v194
        %v196 = vrot.slane %v167, %v195
        %v197 = vlaneseq
        %v198 = vshrl.u32 %v197, 7
        %v199 = vsub.s32 7, %v198
        %v200 = vrot.slane %v167, %v199
        %vm209 = vcmask 1040384
        %v210 = vsel %vm209, %v172, -inf
        %v211 = vsel %vm209, %v176, -inf
        %v212 = vsel %vm209, %v180, -inf
        %v213 = vsel %vm209, %v184, -inf
        %v214 = vsel %vm209, %v188, -inf
        %v215 = vmax.f32 %v210, %v214
        %v216 = vsel %vm209, %v192, -inf
        %v217 = vmax.f32 %v211, %v216
        %v218 = vsel %vm209, %v196, -inf
        %v219 = vmax.f32 %v212, %v218
        %v220 = vsel %vm209, %v200, -inf
        %v221 = vmax.f32 %v213, %v220
        %v222 = vmax.f32 %v215, %v217
        %v223 = vmax.f32 %v219, %v221
        %v224 = vmax.f32 %v222, %v223
        %225 = vmax.xlane.f32.xlu0 %v224
        %v226 = vpop.xlane.xlu0 %225
        %v228 = vlaneseq
        %v229 = vshrl.u32 %v228, 7
        %v230 = vsub.s32 0, %v229
        %v231 = vrot.slane %v226, %v230
        %v233 = vsub.f32 %v167, %v231
        %v234 = vmul.f32 %v233, 1.442695
        %v235 = vpow.pop %v234
        %v236 = vld [vmem:[%s1] sm:$0xff]
        %v237 = vld [vmem:[%s1 + $0x8] sm:$0xff]
        %v238 = vld [vmem:[%s1 + $0x10] sm:$0xff]
        %v239 = vld [vmem:[%s1 + $0x18] sm:$0xff]
        %v240 = vld [vmem:[%s1 + $0x20] sm:$0xff]
        %v241 = vld [vmem:[%s1 + $0x28] sm:$0xff]
        %v242 = vld [vmem:[%s1 + $0x30] sm:$0xff]
        %v243 = vld [vmem:[%s1 + $0x38] sm:$0xff]
        %v244 = vld [vmem:[%s1 + $0x40] sm:$0xff]
        %v245 = vld [vmem:[%s1 + $0x48] sm:$0xff]
        %v246 = vld [vmem:[%s1 + $0x50] sm:$0xff]
        %v247 = vld [vmem:[%s1 + $0x58] sm:$0xff]
        %v248 = vld [vmem:[%s1 + $0x60] sm:$0xff]
        %v249 = vld [vmem:[%s1 + $0x68] sm:$0xff]
        %v250 = vld [vmem:[%s1 + $0x70] sm:$0xff]
        %v251 = vld [vmem:[%s1 + $0x78] sm:$0xff]
        %v252 = vld [vmem:[%s1 + $0x80] sm:$0xff]
        %v253 = vld [vmem:[%s1 + $0x88] sm:$0xff]
        %v254 = vld [vmem:[%s1 + $0x90] sm:$0xff]
        %v255 = vld [vmem:[%s1 + $0x98] sm:$0xff]
        %v256 = vld [vmem:[%s1 + $0xa0] sm:$0xff]
        %v257 = vld [vmem:[%s1 + $0xa8] sm:$0xff]
        %v258 = vld [vmem:[%s1 + $0xb0] sm:$0xff]
        %v259 = vld [vmem:[%s1 + $0xb8] sm:$0xff]
        %v260 = vld [vmem:[%s1 + $0xc0] sm:$0xff]
        %v261 = vld [vmem:[%s1 + $0xc8] sm:$0xff]
        %v262 = vld [vmem:[%s1 + $0xd0] sm:$0xff]
        %v263 = vld [vmem:[%s1 + $0xd8] sm:$0xff]
        %v264 = vld [vmem:[%s1 + $0xe0] sm:$0xff]
        %v265 = vld [vmem:[%s1 + $0xe8] sm:$0xff]
        %v266 = vld [vmem:[%s1 + $0xf0] sm:$0xff]
        %v267 = vld [vmem:[%s1 + $0xf8] sm:$0xff]
        %v268 = vld [vmem:[%s1 + $0x100] sm:$0xff]
        %v269 = vld [vmem:[%s1 + $0x108] sm:$0xff]
        %v270 = vld [vmem:[%s1 + $0x110] sm:$0xff]
        %v271 = vld [vmem:[%s1 + $0x118] sm:$0xff]
        %v272 = vld [vmem:[%s1 + $0x120] sm:$0xff]
        %v273 = vld [vmem:[%s1 + $0x128] sm:$0xff]
        %v274 = vld [vmem:[%s1 + $0x130] sm:$0xff]
        %v275 = vld [vmem:[%s1 + $0x138] sm:$0xff]
        %v276 = vld [vmem:[%s1 + $0x140] sm:$0xff]
        %v277 = vld [vmem:[%s1 + $0x148] sm:$0xff]
        %v278 = vld [vmem:[%s1 + $0x150] sm:$0xff]
        %v279 = vld [vmem:[%s1 + $0x158] sm:$0xff]
        %v280 = vld [vmem:[%s1 + $0x160] sm:$0xff]
        %v281 = vld [vmem:[%s1 + $0x168] sm:$0xff]
        %v282 = vld [vmem:[%s1 + $0x170] sm:$0xff]
        %v283 = vld [vmem:[%s1 + $0x178] sm:$0xff]
        %v284 = vld [vmem:[%s1 + $0x180] sm:$0xff]
        %v285 = vld [vmem:[%s1 + $0x188] sm:$0xff]
        %v286 = vld [vmem:[%s1 + $0x190] sm:$0xff]
        %v287 = vld [vmem:[%s1 + $0x198] sm:$0xff]
        %v288 = vld [vmem:[%s1 + $0x1a0] sm:$0xff]
        %v289 = vld [vmem:[%s1 + $0x1a8] sm:$0xff]
        %v290 = vld [vmem:[%s1 + $0x1b0] sm:$0xff]
        %v291 = vld [vmem:[%s1 + $0x1b8] sm:$0xff]
        %v292 = vld [vmem:[%s1 + $0x1c0] sm:$0xff]
        %v293 = vld [vmem:[%s1 + $0x1c8] sm:$0xff]
        %v294 = vld [vmem:[%s1 + $0x1d0] sm:$0xff]
        %v295 = vld [vmem:[%s1 + $0x1d8] sm:$0xff]
        %v296 = vld [vmem:[%s1 + $0x1e0] sm:$0xff]
        %v297 = vld [vmem:[%s1 + $0x1e8] sm:$0xff]
        %v298 = vld [vmem:[%s1 + $0x1f0] sm:$0xff]
        %v299 = vld [vmem:[%s1 + $0x1f8] sm:$0xff]
        %v300 = vld [vmem:[%s1 + $0x200] sm:$0xff]
        %v301 = vld [vmem:[%s1 + $0x208] sm:$0xff]
        %v302 = vld [vmem:[%s1 + $0x210] sm:$0xff]
        %v303 = vld [vmem:[%s1 + $0x218] sm:$0xff]
        %v304 = vld [vmem:[%s1 + $0x220] sm:$0xff]
        %v305 = vld [vmem:[%s1 + $0x228] sm:$0xff]
        %v306 = vld [vmem:[%s1 + $0x230] sm:$0xff]
        %v307 = vld [vmem:[%s1 + $0x238] sm:$0xff]
        %v308 = vld [vmem:[%s1 + $0x240] sm:$0xff]
        %v309 = vld [vmem:[%s1 + $0x248] sm:$0xff]
        %v310 = vld [vmem:[%s1 + $0x250] sm:$0xff]
        %v311 = vld [vmem:[%s1 + $0x258] sm:$0xff]
        %v312 = vld [vmem:[%s1 + $0x260] sm:$0xff]
        %v313 = vld [vmem:[%s1 + $0x268] sm:$0xff]
        %v314 = vld [vmem:[%s1 + $0x270] sm:$0xff]
        %v315 = vld [vmem:[%s1 + $0x278] sm:$0xff]
        %v316 = vld [vmem:[%s1 + $0x280] sm:$0xff]
        %v317 = vld [vmem:[%s1 + $0x288] sm:$0xff]
        %v318 = vld [vmem:[%s1 + $0x290] sm:$0xff]
        %v319 = vld [vmem:[%s1 + $0x298] sm:$0xff]
        %v320 = vld [vmem:[%s1 + $0x2a0] sm:$0xff]
        %v321 = vld [vmem:[%s1 + $0x2a8] sm:$0xff]
        %v322 = vld [vmem:[%s1 + $0x2b0] sm:$0xff]
        %v323 = vld [vmem:[%s1 + $0x2b8] sm:$0xff]
        %v324 = vld [vmem:[%s1 + $0x2c0] sm:$0xff]
        %v325 = vld [vmem:[%s1 + $0x2c8] sm:$0xff]
        %v326 = vld [vmem:[%s1 + $0x2d0] sm:$0xff]
        %v327 = vld [vmem:[%s1 + $0x2d8] sm:$0xff]
        %v328 = vld [vmem:[%s1 + $0x2e0] sm:$0xff]
        %v329 = vld [vmem:[%s1 + $0x2e8] sm:$0xff]
        %v330 = vld [vmem:[%s1 + $0x2f0] sm:$0xff]
        %v331 = vld [vmem:[%s1 + $0x2f8] sm:$0xff]
        %v332 = vld [vmem:[%s1 + $0x300] sm:$0xff]
        %v333 = vld [vmem:[%s1 + $0x308] sm:$0xff]
        %v334 = vld [vmem:[%s1 + $0x310] sm:$0xff]
        %v335 = vld [vmem:[%s1 + $0x318] sm:$0xff]
        %v336 = vld [vmem:[%s1 + $0x320] sm:$0xff]
        %v337 = vld [vmem:[%s1 + $0x328] sm:$0xff]
        %v338 = vld [vmem:[%s1 + $0x330] sm:$0xff]
        %v339 = vld [vmem:[%s1 + $0x338] sm:$0xff]
        %v340 = vld [vmem:[%s1 + $0x340] sm:$0xff]
        %v341 = vld [vmem:[%s1 + $0x348] sm:$0xff]
        %v342 = vld [vmem:[%s1 + $0x350] sm:$0xff]
        %v343 = vld [vmem:[%s1 + $0x358] sm:$0xff]
        %v344 = vld [vmem:[%s1 + $0x360] sm:$0xff]
        %v345 = vld [vmem:[%s1 + $0x368] sm:$0xff]
        %v346 = vld [vmem:[%s1 + $0x370] sm:$0xff]
        %v347 = vld [vmem:[%s1 + $0x378] sm:$0xff]
        %v348 = vld [vmem:[%s1 + $0x380] sm:$0xff]
        %v349 = vld [vmem:[%s1 + $0x388] sm:$0xff]
        %v350 = vld [vmem:[%s1 + $0x390] sm:$0xff]
        %v351 = vld [vmem:[%s1 + $0x398] sm:$0xff]
        %v352 = vld [vmem:[%s1 + $0x3a0] sm:$0xff]
        %v353 = vld [vmem:[%s1 + $0x3a8] sm:$0xff]
        %v354 = vld [vmem:[%s1 + $0x3b0] sm:$0xff]
        %v355 = vld [vmem:[%s1 + $0x3b8] sm:$0xff]
        %v356 = vld [vmem:[%s1 + $0x3c0] sm:$0xff]
        %v357 = vld [vmem:[%s1 + $0x3c8] sm:$0xff]
        %v358 = vld [vmem:[%s1 + $0x3d0] sm:$0xff]
        %v359 = vld [vmem:[%s1 + $0x3d8] sm:$0xff]
        %v360 = vld [vmem:[%s1 + $0x3e0] sm:$0xff]
        %v361 = vld [vmem:[%s1 + $0x3e8] sm:$0xff]
        %v362 = vld [vmem:[%s1 + $0x3f0] sm:$0xff]
        %v363 = vld [vmem:[%s1 + $0x3f8] sm:$0xff]
        %v365 = vlaneseq
        %v366 = vshrl.u32 %v365, 7
        %v367 = vsub.s32 0, %v366
        %v368 = vrot.slane %v235, %v367
        %v369 = vlaneseq
        %v370 = vshrl.u32 %v369, 7
        %v371 = vsub.s32 1, %v370
        %v372 = vrot.slane %v235, %v371
        %v373 = vlaneseq
        %v374 = vshrl.u32 %v373, 7
        %v375 = vsub.s32 2, %v374
        %v376 = vrot.slane %v235, %v375
        %v377 = vlaneseq
        %v378 = vshrl.u32 %v377, 7
        %v379 = vsub.s32 3, %v378
        %v380 = vrot.slane %v235, %v379
        %v381 = vlaneseq
        %v382 = vshrl.u32 %v381, 7
        %v383 = vsub.s32 4, %v382
        %v384 = vrot.slane %v235, %v383
        %v385 = vlaneseq
        %v386 = vshrl.u32 %v385, 7
        %v387 = vsub.s32 5, %v386
        %v388 = vrot.slane %v235, %v387
        %v389 = vlaneseq
        %v390 = vshrl.u32 %v389, 7
        %v391 = vsub.s32 6, %v390
        %v392 = vrot.slane %v235, %v391
        %v393 = vlaneseq
        %v394 = vshrl.u32 %v393, 7
        %v395 = vsub.s32 7, %v394
        %v396 = vrot.slane %v235, %v395
        %405 = vmatprep.subr.mxu0 0.0
        %406 = vmatpush1.msra.mxu0 %v251
        %407 = vmatprep.subr.mxu0 0.0
        %408 = vmatpush1.msra.mxu0 %v250
        %409 = vmatprep.subr.mxu0 0.0
        %410 = vmatpush1.msra.mxu0 %v249
        %411 = vmatprep.subr.mxu0 0.0
        %412 = vmatpush1.msra.mxu0 %v248
        %413 = vmatprep.subr.mxu0 0.0
        %414 = vmatpush1.msra.mxu0 %v247
        %415 = vmatprep.subr.mxu0 0.0
        %416 = vmatpush1.msra.mxu0 %v246
        %417 = vmatprep.subr.mxu0 0.0
        %418 = vmatpush1.msra.mxu0 %v245
        %419 = vmatprep.subr.mxu0 0.0
        %420 = vmatpush1.msra.mxu0 %v244
        %421 = vmatprep.subr.mxu0 0.0
        %422 = vmatpush1.msra.mxu0 %v243
        %423 = vmatprep.subr.mxu0 0.0
        %424 = vmatpush1.msra.mxu0 %v242
        %425 = vmatprep.subr.mxu0 0.0
        %426 = vmatpush1.msra.mxu0 %v241
        %427 = vmatprep.subr.mxu0 0.0
        %428 = vmatpush1.msra.mxu0 %v240
        %429 = vmatprep.subr.mxu0 0.0
        %430 = vmatpush1.msra.mxu0 %v239
        %431 = vmatprep.subr.mxu0 0.0
        %432 = vmatpush1.msra.mxu0 %v238
        %433 = vmatprep.subr.mxu0 0.0
        %434 = vmatpush1.msra.mxu0 %v237
        %435 = vmatprep.subr.mxu0 0.0
        %436 = vmatpush1.msra.mxu0 %v236
        %437 = vmatprep.subr.mxu0 0.0
        %438 = vmatpush2.msra.mxu0 %v267
        %439 = vmatprep.subr.mxu0 0.0
        %440 = vmatpush2.msra.mxu0 %v266
        %441 = vmatprep.subr.mxu0 0.0
        %442 = vmatpush2.msra.mxu0 %v265
        %443 = vmatprep.subr.mxu0 0.0
        %444 = vmatpush2.msra.mxu0 %v264
        %445 = vmatprep.subr.mxu0 0.0
        %446 = vmatpush2.msra.mxu0 %v263
        %447 = vmatprep.subr.mxu0 0.0
        %448 = vmatpush2.msra.mxu0 %v262
        %449 = vmatprep.subr.mxu0 0.0
        %450 = vmatpush2.msra.mxu0 %v261
        %451 = vmatprep.subr.mxu0 0.0
        %452 = vmatpush2.msra.mxu0 %v260
        %453 = vmatprep.subr.mxu0 0.0
        %454 = vmatpush2.msra.mxu0 %v259
        %455 = vmatprep.subr.mxu0 0.0
        %456 = vmatpush2.msra.mxu0 %v258
        %457 = vmatprep.subr.mxu0 0.0
        %458 = vmatpush2.msra.mxu0 %v257
        %459 = vmatprep.subr.mxu0 0.0
        %460 = vmatpush2.msra.mxu0 %v256
        %461 = vmatprep.subr.mxu0 0.0
        %462 = vmatpush2.msra.mxu0 %v255
        %463 = vmatprep.subr.mxu0 0.0
        %464 = vmatpush2.msra.mxu0 %v254
        %465 = vmatprep.subr.mxu0 0.0
        %466 = vmatpush2.msra.mxu0 %v253
        %467 = vmatprep.subr.mxu0 0.0
        %468 = vmatpush2.msra.mxu0 %v252
        %469 = vmatprep.mubr.f32.mxu0 %v372
        %470 = vmatmul.mubr.f32.gmra.mxu0 %v368
        %v471 = vpop.f32.mrf.mxu0
        %v472 = vadd.f32 0.0, %v471
        %v473 = vpop.f32.mrf.mxu0
        %474 = vdwg.mxu0
        %475 = vmatprep.subr.mxu0 0.0
        %476 = vmatpush1.msra.mxu0 %v283
        %477 = vmatprep.subr.mxu0 0.0
        %478 = vmatpush1.msra.mxu0 %v282
        %479 = vmatprep.subr.mxu0 0.0
        %480 = vmatpush1.msra.mxu0 %v281
        %481 = vmatprep.subr.mxu0 0.0
        %482 = vmatpush1.msra.mxu0 %v280
        %483 = vmatprep.subr.mxu0 0.0
        %484 = vmatpush1.msra.mxu0 %v279
        %485 = vmatprep.subr.mxu0 0.0
        %486 = vmatpush1.msra.mxu0 %v278
        %487 = vmatprep.subr.mxu0 0.0
        %488 = vmatpush1.msra.mxu0 %v277
        %489 = vmatprep.subr.mxu0 0.0
        %490 = vmatpush1.msra.mxu0 %v276
        %491 = vmatprep.subr.mxu0 0.0
        %492 = vmatpush1.msra.mxu0 %v275
        %493 = vmatprep.subr.mxu0 0.0
        %494 = vmatpush1.msra.mxu0 %v274
        %495 = vmatprep.subr.mxu0 0.0
        %496 = vmatpush1.msra.mxu0 %v273
        %497 = vmatprep.subr.mxu0 0.0
        %498 = vmatpush1.msra.mxu0 %v272
        %499 = vmatprep.subr.mxu0 0.0
        %500 = vmatpush1.msra.mxu0 %v271
        %501 = vmatprep.subr.mxu0 0.0
        %502 = vmatpush1.msra.mxu0 %v270
        %503 = vmatprep.subr.mxu0 0.0
        %504 = vmatpush1.msra.mxu0 %v269
        %505 = vmatprep.subr.mxu0 0.0
        %506 = vmatpush1.msra.mxu0 %v268
        %507 = vmatprep.subr.mxu0 0.0
        %508 = vmatpush2.msra.mxu0 %v299
        %509 = vmatprep.subr.mxu0 0.0
        %510 = vmatpush2.msra.mxu0 %v298
        %511 = vmatprep.subr.mxu0 0.0
        %512 = vmatpush2.msra.mxu0 %v297
        %513 = vmatprep.subr.mxu0 0.0
        %514 = vmatpush2.msra.mxu0 %v296
        %515 = vmatprep.subr.mxu0 0.0
        %516 = vmatpush2.msra.mxu0 %v295
        %517 = vmatprep.subr.mxu0 0.0
        %518 = vmatpush2.msra.mxu0 %v294
        %519 = vmatprep.subr.mxu0 0.0
        %520 = vmatpush2.msra.mxu0 %v293
        %521 = vmatprep.subr.mxu0 0.0
        %522 = vmatpush2.msra.mxu0 %v292
        %523 = vmatprep.subr.mxu0 0.0
        %524 = vmatpush2.msra.mxu0 %v291
        %525 = vmatprep.subr.mxu0 0.0
        %526 = vmatpush2.msra.mxu0 %v290
        %527 = vmatprep.subr.mxu0 0.0
        %528 = vmatpush2.msra.mxu0 %v289
        %529 = vmatprep.subr.mxu0 0.0
        %530 = vmatpush2.msra.mxu0 %v288
        %531 = vmatprep.subr.mxu0 0.0
        %532 = vmatpush2.msra.mxu0 %v287
        %533 = vmatprep.subr.mxu0 0.0
        %534 = vmatpush2.msra.mxu0 %v286
        %535 = vmatprep.subr.mxu0 0.0
        %536 = vmatpush2.msra.mxu0 %v285
        %537 = vmatprep.subr.mxu0 0.0
        %538 = vmatpush2.msra.mxu0 %v284
        %539 = vmatprep.mubr.f32.mxu0 %v380
        %540 = vmatmul.mubr.f32.gmra.mxu0 %v376
        %v541 = vpop.f32.mrf.mxu0
        %v542 = vadd.f32 %v472, %v541
        %v543 = vpop.f32.mrf.mxu0
        %544 = vdwg.mxu0
        %545 = vmatprep.subr.mxu0 0.0
        %546 = vmatpush1.msra.mxu0 %v315
        %547 = vmatprep.subr.mxu0 0.0
        %548 = vmatpush1.msra.mxu0 %v314
        %549 = vmatprep.subr.mxu0 0.0
        %550 = vmatpush1.msra.mxu0 %v313
        %551 = vmatprep.subr.mxu0 0.0
        %552 = vmatpush1.msra.mxu0 %v312
        %553 = vmatprep.subr.mxu0 0.0
        %554 = vmatpush1.msra.mxu0 %v311
        %555 = vmatprep.subr.mxu0 0.0
        %556 = vmatpush1.msra.mxu0 %v310
        %557 = vmatprep.subr.mxu0 0.0
        %558 = vmatpush1.msra.mxu0 %v309
        %559 = vmatprep.subr.mxu0 0.0
        %560 = vmatpush1.msra.mxu0 %v308
        %561 = vmatprep.subr.mxu0 0.0
        %562 = vmatpush1.msra.mxu0 %v307
        %563 = vmatprep.subr.mxu0 0.0
        %564 = vmatpush1.msra.mxu0 %v306
        %565 = vmatprep.subr.mxu0 0.0
        %566 = vmatpush1.msra.mxu0 %v305
        %567 = vmatprep.subr.mxu0 0.0
        %568 = vmatpush1.msra.mxu0 %v304
        %569 = vmatprep.subr.mxu0 0.0
        %570 = vmatpush1.msra.mxu0 %v303
        %571 = vmatprep.subr.mxu0 0.0
        %572 = vmatpush1.msra.mxu0 %v302
        %573 = vmatprep.subr.mxu0 0.0
        %574 = vmatpush1.msra.mxu0 %v301
        %575 = vmatprep.subr.mxu0 0.0
        %576 = vmatpush1.msra.mxu0 %v300
        %577 = vmatprep.subr.mxu0 0.0
        %578 = vmatpush2.msra.mxu0 %v331
        %579 = vmatprep.subr.mxu0 0.0
        %580 = vmatpush2.msra.mxu0 %v330
        %581 = vmatprep.subr.mxu0 0.0
        %582 = vmatpush2.msra.mxu0 %v329
        %583 = vmatprep.subr.mxu0 0.0
        %584 = vmatpush2.msra.mxu0 %v328
        %585 = vmatprep.subr.mxu0 0.0
        %586 = vmatpush2.msra.mxu0 %v327
        %587 = vmatprep.subr.mxu0 0.0
        %588 = vmatpush2.msra.mxu0 %v326
        %589 = vmatprep.subr.mxu0 0.0
        %590 = vmatpush2.msra.mxu0 %v325
        %591 = vmatprep.subr.mxu0 0.0
        %592 = vmatpush2.msra.mxu0 %v324
        %593 = vmatprep.subr.mxu0 0.0
        %594 = vmatpush2.msra.mxu0 %v323
        %595 = vmatprep.subr.mxu0 0.0
        %596 = vmatpush2.msra.mxu0 %v322
        %597 = vmatprep.subr.mxu0 0.0
        %598 = vmatpush2.msra.mxu0 %v321
        %599 = vmatprep.subr.mxu0 0.0
        %600 = vmatpush2.msra.mxu0 %v320
        %601 = vmatprep.subr.mxu0 0.0
        %602 = vmatpush2.msra.mxu0 %v319
        %603 = vmatprep.subr.mxu0 0.0
        %604 = vmatpush2.msra.mxu0 %v318
        %605 = vmatprep.subr.mxu0 0.0
        %606 = vmatpush2.msra.mxu0 %v317
        %607 = vmatprep.subr.mxu0 0.0
        %608 = vmatpush2.msra.mxu0 %v316
        %609 = vmatprep.mubr.f32.mxu0 %v388
        %610 = vmatmul.mubr.f32.gmra.mxu0 %v384
        %v611 = vpop.f32.mrf.mxu0
        %v612 = vadd.f32 %v542, %v611
        %v613 = vpop.f32.mrf.mxu0
        %614 = vdwg.mxu0
        %615 = vmatprep.subr.mxu0 0.0
        %616 = vmatpush1.msra.mxu0 %v347
        %617 = vmatprep.subr.mxu0 0.0
        %618 = vmatpush1.msra.mxu0 %v346
        %619 = vmatprep.subr.mxu0 0.0
        %620 = vmatpush1.msra.mxu0 %v345
        %621 = vmatprep.subr.mxu0 0.0
        %622 = vmatpush1.msra.mxu0 %v344
        %623 = vmatprep.subr.mxu0 0.0
        %624 = vmatpush1.msra.mxu0 %v343
        %625 = vmatprep.subr.mxu0 0.0
        %626 = vmatpush1.msra.mxu0 %v342
        %627 = vmatprep.subr.mxu0 0.0
        %628 = vmatpush1.msra.mxu0 %v341
        %629 = vmatprep.subr.mxu0 0.0
        %630 = vmatpush1.msra.mxu0 %v340
        %631 = vmatprep.subr.mxu0 0.0
        %632 = vmatpush1.msra.mxu0 %v339
        %633 = vmatprep.subr.mxu0 0.0
        %634 = vmatpush1.msra.mxu0 %v338
        %635 = vmatprep.subr.mxu0 0.0
        %636 = vmatpush1.msra.mxu0 %v337
        %637 = vmatprep.subr.mxu0 0.0
        %638 = vmatpush1.msra.mxu0 %v336
        %639 = vmatprep.subr.mxu0 0.0
        %640 = vmatpush1.msra.mxu0 %v335
        %641 = vmatprep.subr.mxu0 0.0
        %642 = vmatpush1.msra.mxu0 %v334
        %643 = vmatprep.subr.mxu0 0.0
        %644 = vmatpush1.msra.mxu0 %v333
        %645 = vmatprep.subr.mxu0 0.0
        %646 = vmatpush1.msra.mxu0 %v332
        %647 = vmatprep.subr.mxu0 0.0
        %648 = vmatpush2.msra.mxu0 %v363
        %649 = vmatprep.subr.mxu0 0.0
        %650 = vmatpush2.msra.mxu0 %v362
        %651 = vmatprep.subr.mxu0 0.0
        %652 = vmatpush2.msra.mxu0 %v361
        %653 = vmatprep.subr.mxu0 0.0
        %654 = vmatpush2.msra.mxu0 %v360
        %655 = vmatprep.subr.mxu0 0.0
        %656 = vmatpush2.msra.mxu0 %v359
        %657 = vmatprep.subr.mxu0 0.0
        %658 = vmatpush2.msra.mxu0 %v358
        %659 = vmatprep.subr.mxu0 0.0
        %660 = vmatpush2.msra.mxu0 %v357
        %661 = vmatprep.subr.mxu0 0.0
        %662 = vmatpush2.msra.mxu0 %v356
        %663 = vmatprep.subr.mxu0 0.0
        %664 = vmatpush2.msra.mxu0 %v355
        %665 = vmatprep.subr.mxu0 0.0
        %666 = vmatpush2.msra.mxu0 %v354
        %667 = vmatprep.subr.mxu0 0.0
        %668 = vmatpush2.msra.mxu0 %v353
        %669 = vmatprep.subr.mxu0 0.0
        %670 = vmatpush2.msra.mxu0 %v352
        %671 = vmatprep.subr.mxu0 0.0
        %672 = vmatpush2.msra.mxu0 %v351
        %673 = vmatprep.subr.mxu0 0.0
        %674 = vmatpush2.msra.mxu0 %v350
        %675 = vmatprep.subr.mxu0 0.0
        %676 = vmatpush2.msra.mxu0 %v349
        %677 = vmatprep.subr.mxu0 0.0
        %678 = vmatpush2.msra.mxu0 %v348
        %679 = vmatprep.mubr.f32.mxu0 %v396
        %680 = vmatmul.mubr.f32.gmra.mxu0 %v392
        %v681 = vpop.f32.mrf.mxu0
        %v682 = vadd.f32 %v612, %v681
        %v683 = vpop.f32.mrf.mxu0
        %684 = vdwg.mxu0
        %v685 = vld [vmem:[%s2] sm:$0xff]
        %v686 = vld [vmem:[%s2 + $0x8] sm:$0xff]
        %v687 = vld [vmem:[%s2 + $0x10] sm:$0xff]
        %v688 = vld [vmem:[%s2 + $0x18] sm:$0xff]
        %v689 = vld [vmem:[%s2 + $0x20] sm:$0xff]
        %v690 = vld [vmem:[%s2 + $0x28] sm:$0xff]
        %v691 = vld [vmem:[%s2 + $0x30] sm:$0xff]
        %v692 = vld [vmem:[%s2 + $0x38] sm:$0xff]
        %v693 = vld [vmem:[%s2 + $0x40] sm:$0xff]
        %v694 = vld [vmem:[%s2 + $0x48] sm:$0xff]
        %v695 = vld [vmem:[%s2 + $0x50] sm:$0xff]
        %v696 = vld [vmem:[%s2 + $0x58] sm:$0xff]
        %v697 = vld [vmem:[%s2 + $0x60] sm:$0xff]
        %v698 = vld [vmem:[%s2 + $0x68] sm:$0xff]
        %v699 = vld [vmem:[%s2 + $0x70] sm:$0xff]
        %v700 = vld [vmem:[%s2 + $0x78] sm:$0xff]
        %v701 = vld [vmem:[%s2 + $0x80] sm:$0xff]
        %v702 = vld [vmem:[%s2 + $0x88] sm:$0xff]
        %v703 = vld [vmem:[%s2 + $0x90] sm:$0xff]
        %v704 = vld [vmem:[%s2 + $0x98] sm:$0xff]
        %v705 = vld [vmem:[%s2 + $0xa0] sm:$0xff]
        %v706 = vld [vmem:[%s2 + $0xa8] sm:$0xff]
        %v707 = vld [vmem:[%s2 + $0xb0] sm:$0xff]
        %v708 = vld [vmem:[%s2 + $0xb8] sm:$0xff]
        %v709 = vld [vmem:[%s2 + $0xc0] sm:$0xff]
        %v710 = vld [vmem:[%s2 + $0xc8] sm:$0xff]
        %v711 = vld [vmem:[%s2 + $0xd0] sm:$0xff]
        %v712 = vld [vmem:[%s2 + $0xd8] sm:$0xff]
        %v713 = vld [vmem:[%s2 + $0xe0] sm:$0xff]
        %v714 = vld [vmem:[%s2 + $0xe8] sm:$0xff]
        %v715 = vld [vmem:[%s2 + $0xf0] sm:$0xff]
        %v716 = vld [vmem:[%s2 + $0xf8] sm:$0xff]
        %v717 = vld [vmem:[%s2 + $0x100] sm:$0xff]
        %v718 = vld [vmem:[%s2 + $0x108] sm:$0xff]
        %v719 = vld [vmem:[%s2 + $0x110] sm:$0xff]
        %v720 = vld [vmem:[%s2 + $0x118] sm:$0xff]
        %v721 = vld [vmem:[%s2 + $0x120] sm:$0xff]
        %v722 = vld [vmem:[%s2 + $0x128] sm:$0xff]
        %v723 = vld [vmem:[%s2 + $0x130] sm:$0xff]
        %v724 = vld [vmem:[%s2 + $0x138] sm:$0xff]
        %v725 = vld [vmem:[%s2 + $0x140] sm:$0xff]
        %v726 = vld [vmem:[%s2 + $0x148] sm:$0xff]
        %v727 = vld [vmem:[%s2 + $0x150] sm:$0xff]
        %v728 = vld [vmem:[%s2 + $0x158] sm:$0xff]
        %v729 = vld [vmem:[%s2 + $0x160] sm:$0xff]
        %v730 = vld [vmem:[%s2 + $0x168] sm:$0xff]
        %v731 = vld [vmem:[%s2 + $0x170] sm:$0xff]
        %v732 = vld [vmem:[%s2 + $0x178] sm:$0xff]
        %v733 = vld [vmem:[%s2 + $0x180] sm:$0xff]
        %v734 = vld [vmem:[%s2 + $0x188] sm:$0xff]
        %v735 = vld [vmem:[%s2 + $0x190] sm:$0xff]
        %v736 = vld [vmem:[%s2 + $0x198] sm:$0xff]
        %v737 = vld [vmem:[%s2 + $0x1a0] sm:$0xff]
        %v738 = vld [vmem:[%s2 + $0x1a8] sm:$0xff]
        %v739 = vld [vmem:[%s2 + $0x1b0] sm:$0xff]
        %v740 = vld [vmem:[%s2 + $0x1b8] sm:$0xff]
        %v741 = vld [vmem:[%s2 + $0x1c0] sm:$0xff]
        %v742 = vld [vmem:[%s2 + $0x1c8] sm:$0xff]
        %v743 = vld [vmem:[%s2 + $0x1d0] sm:$0xff]
        %v744 = vld [vmem:[%s2 + $0x1d8] sm:$0xff]
        %v745 = vld [vmem:[%s2 + $0x1e0] sm:$0xff]
        %v746 = vld [vmem:[%s2 + $0x1e8] sm:$0xff]
        %v747 = vld [vmem:[%s2 + $0x1f0] sm:$0xff]
        %v748 = vld [vmem:[%s2 + $0x1f8] sm:$0xff]
        %vm749 = vcmask 523264
        %v751 = vsel %vm749, %v682, 0
        %753 = vmatprep.subr.mxu0 0.0
        %754 = vmatpush1.msra.mxu0 0.0
        %755 = vmatprep.subr.mxu0 0.0
        %756 = vmatpush1.msra.mxu0 0.0
        %757 = vmatprep.subr.mxu0 0.0
        %758 = vmatpush1.msra.mxu0 0.0
        %759 = vmatprep.subr.mxu0 0.0
        %760 = vmatpush1.msra.mxu0 0.0
        %761 = vmatprep.subr.mxu0 0.0
        %762 = vmatpush1.msra.mxu0 0.0
        %763 = vmatprep.subr.mxu0 0.0
        %764 = vmatpush1.msra.mxu0 0.0
        %765 = vmatprep.subr.mxu0 0.0
        %766 = vmatpush1.msra.mxu0 0.0
        %767 = vmatprep.subr.mxu0 0.0
        %768 = vmatpush1.msra.mxu0 0.0
        %769 = vmatprep.subr.mxu0 %v742
        %770 = vmatpush1.msra.mxu0 %v741
        %771 = vmatprep.subr.mxu0 %v734
        %772 = vmatpush1.msra.mxu0 %v733
        %773 = vmatprep.subr.mxu0 %v726
        %774 = vmatpush1.msra.mxu0 %v725
        %775 = vmatprep.subr.mxu0 %v718
        %776 = vmatpush1.msra.mxu0 %v717
        %777 = vmatprep.subr.mxu0 %v710
        %778 = vmatpush1.msra.mxu0 %v709
        %779 = vmatprep.subr.mxu0 %v702
        %780 = vmatpush1.msra.mxu0 %v701
        %781 = vmatprep.subr.mxu0 %v694
        %782 = vmatpush1.msra.mxu0 %v693
        %783 = vmatprep.subr.mxu0 %v686
        %784 = vmatpush1.msra.mxu0 %v685
        %785 = vmatprep.subr.mxu0 0.0
        %786 = vmatpush2.msra.mxu0 0.0
        %787 = vmatprep.subr.mxu0 0.0
        %788 = vmatpush2.msra.mxu0 0.0
        %789 = vmatprep.subr.mxu0 0.0
        %790 = vmatpush2.msra.mxu0 0.0
        %791 = vmatprep.subr.mxu0 0.0
        %792 = vmatpush2.msra.mxu0 0.0
        %793 = vmatprep.subr.mxu0 0.0
        %794 = vmatpush2.msra.mxu0 0.0
        %795 = vmatprep.subr.mxu0 0.0
        %796 = vmatpush2.msra.mxu0 0.0
        %797 = vmatprep.subr.mxu0 0.0
        %798 = vmatpush2.msra.mxu0 0.0
        %799 = vmatprep.subr.mxu0 0.0
        %800 = vmatpush2.msra.mxu0 0.0
        %801 = vmatprep.subr.mxu0 0.0
        %802 = vmatpush2.msra.mxu0 0.0
        %803 = vmatprep.subr.mxu0 0.0
        %804 = vmatpush2.msra.mxu0 0.0
        %805 = vmatprep.subr.mxu0 0.0
        %806 = vmatpush2.msra.mxu0 0.0
        %807 = vmatprep.subr.mxu0 0.0
        %808 = vmatpush2.msra.mxu0 0.0
        %809 = vmatprep.subr.mxu0 0.0
        %810 = vmatpush2.msra.mxu0 0.0
        %811 = vmatprep.subr.mxu0 0.0
        %812 = vmatpush2.msra.mxu0 0.0
        %813 = vmatprep.subr.mxu0 0.0
        %814 = vmatpush2.msra.mxu0 0.0
        %815 = vmatprep.subr.mxu0 0.0
        %816 = vmatpush2.msra.mxu0 0.0
        %817 = vmatprep.mubr.f32.mxu0 0.0
        %818 = vmatmul.mubr.f32.gmra.mxu0 %v751
        %v819 = vpop.f32.mrf.mxu0
        %v820 = vadd.f32 0.0, %v819
        %v821 = vpop.f32.mrf.mxu0
        %v822 = vadd.f32 0.0, %v821
        %823 = vdwg.mxu0
        %824 = vmatprep.subr.mxu0 0.0
        %825 = vmatpush1.msra.mxu0 0.0
        %826 = vmatprep.subr.mxu0 0.0
        %827 = vmatpush1.msra.mxu0 0.0
        %828 = vmatprep.subr.mxu0 0.0
        %829 = vmatpush1.msra.mxu0 0.0
        %830 = vmatprep.subr.mxu0 0.0
        %831 = vmatpush1.msra.mxu0 0.0
        %832 = vmatprep.subr.mxu0 0.0
        %833 = vmatpush1.msra.mxu0 0.0
        %834 = vmatprep.subr.mxu0 0.0
        %835 = vmatpush1.msra.mxu0 0.0
        %836 = vmatprep.subr.mxu0 0.0
        %837 = vmatpush1.msra.mxu0 0.0
        %838 = vmatprep.subr.mxu0 0.0
        %839 = vmatpush1.msra.mxu0 0.0
        %840 = vmatprep.subr.mxu0 %v744
        %841 = vmatpush1.msra.mxu0 %v743
        %842 = vmatprep.subr.mxu0 %v736
        %843 = vmatpush1.msra.mxu0 %v735
        %844 = vmatprep.subr.mxu0 %v728
        %845 = vmatpush1.msra.mxu0 %v727
        %846 = vmatprep.subr.mxu0 %v720
        %847 = vmatpush1.msra.mxu0 %v719
        %848 = vmatprep.subr.mxu0 %v712
        %849 = vmatpush1.msra.mxu0 %v711
        %850 = vmatprep.subr.mxu0 %v704
        %851 = vmatpush1.msra.mxu0 %v703
        %852 = vmatprep.subr.mxu0 %v696
        %853 = vmatpush1.msra.mxu0 %v695
        %854 = vmatprep.subr.mxu0 %v688
        %855 = vmatpush1.msra.mxu0 %v687
        %856 = vmatprep.subr.mxu0 0.0
        %857 = vmatpush2.msra.mxu0 0.0
        %858 = vmatprep.subr.mxu0 0.0
        %859 = vmatpush2.msra.mxu0 0.0
        %860 = vmatprep.subr.mxu0 0.0
        %861 = vmatpush2.msra.mxu0 0.0
        %862 = vmatprep.subr.mxu0 0.0
        %863 = vmatpush2.msra.mxu0 0.0
        %864 = vmatprep.subr.mxu0 0.0
        %865 = vmatpush2.msra.mxu0 0.0
        %866 = vmatprep.subr.mxu0 0.0
        %867 = vmatpush2.msra.mxu0 0.0
        %868 = vmatprep.subr.mxu0 0.0
        %869 = vmatpush2.msra.mxu0 0.0
        %870 = vmatprep.subr.mxu0 0.0
        %871 = vmatpush2.msra.mxu0 0.0
        %872 = vmatprep.subr.mxu0 0.0
        %873 = vmatpush2.msra.mxu0 0.0
        %874 = vmatprep.subr.mxu0 0.0
        %875 = vmatpush2.msra.mxu0 0.0
        %876 = vmatprep.subr.mxu0 0.0
        %877 = vmatpush2.msra.mxu0 0.0
        %878 = vmatprep.subr.mxu0 0.0
        %879 = vmatpush2.msra.mxu0 0.0
        %880 = vmatprep.subr.mxu0 0.0
        %881 = vmatpush2.msra.mxu0 0.0
        %882 = vmatprep.subr.mxu0 0.0
        %883 = vmatpush2.msra.mxu0 0.0
        %884 = vmatprep.subr.mxu0 0.0
        %885 = vmatpush2.msra.mxu0 0.0
        %886 = vmatprep.subr.mxu0 0.0
        %887 = vmatpush2.msra.mxu0 0.0
        %888 = vmatprep.mubr.f32.mxu0 0.0
        %889 = vmatmul.mubr.f32.gmra.mxu0 %v751
        %v890 = vpop.f32.mrf.mxu0
        %v891 = vadd.f32 0.0, %v890
        %v892 = vpop.f32.mrf.mxu0
        %v893 = vadd.f32 0.0, %v892
        %894 = vdwg.mxu0
        %895 = vmatprep.subr.mxu0 0.0
        %896 = vmatpush1.msra.mxu0 0.0
        %897 = vmatprep.subr.mxu0 0.0
        %898 = vmatpush1.msra.mxu0 0.0
        %899 = vmatprep.subr.mxu0 0.0
        %900 = vmatpush1.msra.mxu0 0.0
        %901 = vmatprep.subr.mxu0 0.0
        %902 = vmatpush1.msra.mxu0 0.0
        %903 = vmatprep.subr.mxu0 0.0
        %904 = vmatpush1.msra.mxu0 0.0
        %905 = vmatprep.subr.mxu0 0.0
        %906 = vmatpush1.msra.mxu0 0.0
        %907 = vmatprep.subr.mxu0 0.0
        %908 = vmatpush1.msra.mxu0 0.0
        %909 = vmatprep.subr.mxu0 0.0
        %910 = vmatpush1.msra.mxu0 0.0
        %911 = vmatprep.subr.mxu0 %v746
        %912 = vmatpush1.msra.mxu0 %v745
        %913 = vmatprep.subr.mxu0 %v738
        %914 = vmatpush1.msra.mxu0 %v737
        %915 = vmatprep.subr.mxu0 %v730
        %916 = vmatpush1.msra.mxu0 %v729
        %917 = vmatprep.subr.mxu0 %v722
        %918 = vmatpush1.msra.mxu0 %v721
        %919 = vmatprep.subr.mxu0 %v714
        %920 = vmatpush1.msra.mxu0 %v713
        %921 = vmatprep.subr.mxu0 %v706
        %922 = vmatpush1.msra.mxu0 %v705
        %923 = vmatprep.subr.mxu0 %v698
        %924 = vmatpush1.msra.mxu0 %v697
        %925 = vmatprep.subr.mxu0 %v690
        %926 = vmatpush1.msra.mxu0 %v689
        %927 = vmatprep.subr.mxu0 0.0
        %928 = vmatpush2.msra.mxu0 0.0
        %929 = vmatprep.subr.mxu0 0.0
        %930 = vmatpush2.msra.mxu0 0.0
        %931 = vmatprep.subr.mxu0 0.0
        %932 = vmatpush2.msra.mxu0 0.0
        %933 = vmatprep.subr.mxu0 0.0
        %934 = vmatpush2.msra.mxu0 0.0
        %935 = vmatprep.subr.mxu0 0.0
        %936 = vmatpush2.msra.mxu0 0.0
        %937 = vmatprep.subr.mxu0 0.0
        %938 = vmatpush2.msra.mxu0 0.0
        %939 = vmatprep.subr.mxu0 0.0
        %940 = vmatpush2.msra.mxu0 0.0
        %941 = vmatprep.subr.mxu0 0.0
        %942 = vmatpush2.msra.mxu0 0.0
        %943 = vmatprep.subr.mxu0 0.0
        %944 = vmatpush2.msra.mxu0 0.0
        %945 = vmatprep.subr.mxu0 0.0
        %946 = vmatpush2.msra.mxu0 0.0
        %947 = vmatprep.subr.mxu0 0.0
        %948 = vmatpush2.msra.mxu0 0.0
        %949 = vmatprep.subr.mxu0 0.0
        %950 = vmatpush2.msra.mxu0 0.0
        %951 = vmatprep.subr.mxu0 0.0
        %952 = vmatpush2.msra.mxu0 0.0
        %953 = vmatprep.subr.mxu0 0.0
        %954 = vmatpush2.msra.mxu0 0.0
        %955 = vmatprep.subr.mxu0 0.0
        %956 = vmatpush2.msra.mxu0 0.0
        %957 = vmatprep.subr.mxu0 0.0
        %958 = vmatpush2.msra.mxu0 0.0
        %959 = vmatprep.mubr.f32.mxu0 0.0
        %960 = vmatmul.mubr.f32.gmra.mxu0 %v751
        %v961 = vpop.f32.mrf.mxu0
        %v962 = vadd.f32 0.0, %v961
        %v963 = vpop.f32.mrf.mxu0
        %v964 = vadd.f32 0.0, %v963
        %965 = vdwg.mxu0
        %966 = vmatprep.subr.mxu0 0.0
        %967 = vmatpush1.msra.mxu0 0.0
        %968 = vmatprep.subr.mxu0 0.0
        %969 = vmatpush1.msra.mxu0 0.0
        %970 = vmatprep.subr.mxu0 0.0
        %971 = vmatpush1.msra.mxu0 0.0
        %972 = vmatprep.subr.mxu0 0.0
        %973 = vmatpush1.msra.mxu0 0.0
        %974 = vmatprep.subr.mxu0 0.0
        %975 = vmatpush1.msra.mxu0 0.0
        %976 = vmatprep.subr.mxu0 0.0
        %977 = vmatpush1.msra.mxu0 0.0
        %978 = vmatprep.subr.mxu0 0.0
        %979 = vmatpush1.msra.mxu0 0.0
        %980 = vmatprep.subr.mxu0 0.0
        %981 = vmatpush1.msra.mxu0 0.0
        %982 = vmatprep.subr.mxu0 %v748
        %983 = vmatpush1.msra.mxu0 %v747
        %984 = vmatprep.subr.mxu0 %v740
        %985 = vmatpush1.msra.mxu0 %v739
        %986 = vmatprep.subr.mxu0 %v732
        %987 = vmatpush1.msra.mxu0 %v731
        %988 = vmatprep.subr.mxu0 %v724
        %989 = vmatpush1.msra.mxu0 %v723
        %990 = vmatprep.subr.mxu0 %v716
        %991 = vmatpush1.msra.mxu0 %v715
        %992 = vmatprep.subr.mxu0 %v708
        %993 = vmatpush1.msra.mxu0 %v707
        %994 = vmatprep.subr.mxu0 %v700
        %995 = vmatpush1.msra.mxu0 %v699
        %996 = vmatprep.subr.mxu0 %v692
        %997 = vmatpush1.msra.mxu0 %v691
        %998 = vmatprep.subr.mxu0 0.0
        %999 = vmatpush2.msra.mxu0 0.0
        %1000 = vmatprep.subr.mxu0 0.0
        %1001 = vmatpush2.msra.mxu0 0.0
        %1002 = vmatprep.subr.mxu0 0.0
        %1003 = vmatpush2.msra.mxu0 0.0
        %1004 = vmatprep.subr.mxu0 0.0
        %1005 = vmatpush2.msra.mxu0 0.0
        %1006 = vmatprep.subr.mxu0 0.0
        %1007 = vmatpush2.msra.mxu0 0.0
        %1008 = vmatprep.subr.mxu0 0.0
        %1009 = vmatpush2.msra.mxu0 0.0
        %1010 = vmatprep.subr.mxu0 0.0
        %1011 = vmatpush2.msra.mxu0 0.0
        %1012 = vmatprep.subr.mxu0 0.0
        %1013 = vmatpush2.msra.mxu0 0.0
        %1014 = vmatprep.subr.mxu0 0.0
        %1015 = vmatpush2.msra.mxu0 0.0
        %1016 = vmatprep.subr.mxu0 0.0
        %1017 = vmatpush2.msra.mxu0 0.0
        %1018 = vmatprep.subr.mxu0 0.0
        %1019 = vmatpush2.msra.mxu0 0.0
        %1020 = vmatprep.subr.mxu0 0.0
        %1021 = vmatpush2.msra.mxu0 0.0
        %1022 = vmatprep.subr.mxu0 0.0
        %1023 = vmatpush2.msra.mxu0 0.0
        %1024 = vmatprep.subr.mxu0 0.0
        %1025 = vmatpush2.msra.mxu0 0.0
        %1026 = vmatprep.subr.mxu0 0.0
        %1027 = vmatpush2.msra.mxu0 0.0
        %1028 = vmatprep.subr.mxu0 0.0
        %1029 = vmatpush2.msra.mxu0 0.0
        %1030 = vmatprep.mubr.f32.mxu0 0.0
        %1031 = vmatmul.mubr.f32.gmra.mxu0 %v751
        %v1032 = vpop.f32.mrf.mxu0
        %v1033 = vadd.f32 0.0, %v1032
        %v1034 = vpop.f32.mrf.mxu0
        %v1035 = vadd.f32 0.0, %v1034
        %1036 = vdwg.mxu0
        %v1045 = vcombine.low %v820, %v822
        %v1046 = vcombine.low %v891, %v893
        %v1047 = vcombine.low %v962, %v964
        %v1048 = vcombine.low %v1033, %v1035
        %v1050 = vunpack.c.l.s4 1966171168
        %v1051 = vunpack.c.0.s8 %v1050
        %v1052 = vlaneseq
        %v1053 = vshrl.u32 %v1052, 7
        %v1054 = vsub.s32 %v1051, %v1053
        %v1055 = vrot.slane %v1045, %v1054
        %v1057 = vunpack.c.l.s4 1966171168
        %v1058 = vunpack.c.0.s8 %v1057
        %v1059 = vlaneseq
        %v1060 = vshrl.u32 %v1059, 7
        %v1061 = vsub.s32 %v1058, %v1060
        %v1062 = vrot.slane %v1046, %v1061
        %v1064 = vunpack.c.l.s4 1966171168
        %v1065 = vunpack.c.0.s8 %v1064
        %v1066 = vlaneseq
        %v1067 = vshrl.u32 %v1066, 7
        %v1068 = vsub.s32 %v1065, %v1067
        %v1069 = vrot.slane %v1047, %v1068
        %v1071 = vunpack.c.l.s4 1966171168
        %v1072 = vunpack.c.0.s8 %v1071
        %v1073 = vlaneseq
        %v1074 = vshrl.u32 %v1073, 7
        %v1075 = vsub.s32 %v1072, %v1074
        %v1076 = vrot.slane %v1048, %v1075
        %v1077 = vcombine.low %v1055, %v1062
        %v1078 = vcombine.low %v1069, %v1076
        %v1080 = vunpack.c.l.s4 1966171168
        %v1081 = vunpack.c.0.s8 %v1080
        %v1082 = vlaneseq
        %v1083 = vshrl.u32 %v1082, 7
        %v1084 = vsub.s32 %v1081, %v1083
        %v1085 = vrot.slane %v1077, %v1084
        %v1087 = vunpack.c.l.s4 1966171168
        %v1088 = vunpack.c.0.s8 %v1087
        %v1089 = vlaneseq
        %v1090 = vshrl.u32 %v1089, 7
        %v1091 = vsub.s32 %v1088, %v1090
        %v1092 = vrot.slane %v1078, %v1091
        %v1093 = vcombine.low %v1085, %v1092
        %v1095 = vrcp.pop %v1093
        %v1096 = vmul.f32 %v235, %v1095
        %v1097 = vadd.f32 %v1096, 2.0
        %v1099 = vlaneseq
        %v1100 = vshrl.u32 %v1099, 7
        %v1101 = vsub.s32 0, %v1100
        %v1102 = vrot.slane %v1097, %v1101
        %v1103 = vlaneseq
        %v1104 = vshrl.u32 %v1103, 7
        %v1105 = vsub.s32 1, %v1104
        %v1106 = vrot.slane %v1097, %v1105
        %v1107 = vlaneseq
        %v1108 = vshrl.u32 %v1107, 7
        %v1109 = vsub.s32 2, %v1108
        %v1110 = vrot.slane %v1097, %v1109
        %v1111 = vlaneseq
        %v1112 = vshrl.u32 %v1111, 7
        %v1113 = vsub.s32 3, %v1112
        %v1114 = vrot.slane %v1097, %v1113
        %v1115 = vlaneseq
        %v1116 = vshrl.u32 %v1115, 7
        %v1117 = vsub.s32 4, %v1116
        %v1118 = vrot.slane %v1097, %v1117
        %v1119 = vlaneseq
        %v1120 = vshrl.u32 %v1119, 7
        %v1121 = vsub.s32 5, %v1120
        %v1122 = vrot.slane %v1097, %v1121
        %v1123 = vlaneseq
        %v1124 = vshrl.u32 %v1123, 7
        %v1125 = vsub.s32 6, %v1124
        %v1126 = vrot.slane %v1097, %v1125
        %v1127 = vlaneseq
        %v1128 = vshrl.u32 %v1127, 7
        %v1129 = vsub.s32 7, %v1128
        %v1130 = vrot.slane %v1097, %v1129
        %v1139 = vsel %vm209, %v1102, -inf
        %v1140 = vsel %vm209, %v1106, -inf
        %v1141 = vsel %vm209, %v1110, -inf
        %v1142 = vsel %vm209, %v1114, -inf
        %v1143 = vsel %vm209, %v1118, -inf
        %v1144 = vmax.f32 %v1139, %v1143
        %v1145 = vsel %vm209, %v1122, -inf
        %v1146 = vmax.f32 %v1140, %v1145
        %v1147 = vsel %vm209, %v1126, -inf
        %v1148 = vmax.f32 %v1141, %v1147
        %v1149 = vsel %vm209, %v1130, -inf
        %v1150 = vmax.f32 %v1142, %v1149
        %v1151 = vmax.f32 %v1144, %v1146
        %v1152 = vmax.f32 %v1148, %v1150
        %v1153 = vmax.f32 %v1151, %v1152
        %1154 = vmax.xlane.f32.xlu0 %v1153
        %v1155 = vpop.xlane.xlu0 %1154
        %v1157 = vlaneseq
        %v1158 = vshrl.u32 %v1157, 7
        %v1159 = vsub.s32 0, %v1158
        %v1160 = vrot.slane %v1155, %v1159
        %v1162 = vsub.f32 %v1097, %v1160
        %v1163 = vmul.f32 %v1162, 1.442695
        %v1164 = vpow.pop %v1163
        %v1166 = vlaneseq
        %v1167 = vshrl.u32 %v1166, 7
        %v1168 = vsub.s32 0, %v1167
        %v1169 = vrot.slane %v1164, %v1168
        %v1170 = vlaneseq
        %v1171 = vshrl.u32 %v1170, 7
        %v1172 = vsub.s32 1, %v1171
        %v1173 = vrot.slane %v1164, %v1172
        %v1174 = vlaneseq
        %v1175 = vshrl.u32 %v1174, 7
        %v1176 = vsub.s32 2, %v1175
        %v1177 = vrot.slane %v1164, %v1176
        %v1178 = vlaneseq
        %v1179 = vshrl.u32 %v1178, 7
        %v1180 = vsub.s32 3, %v1179
        %v1181 = vrot.slane %v1164, %v1180
        %v1182 = vlaneseq
        %v1183 = vshrl.u32 %v1182, 7
        %v1184 = vsub.s32 4, %v1183
        %v1185 = vrot.slane %v1164, %v1184
        %v1186 = vlaneseq
        %v1187 = vshrl.u32 %v1186, 7
        %v1188 = vsub.s32 5, %v1187
        %v1189 = vrot.slane %v1164, %v1188
        %v1190 = vlaneseq
        %v1191 = vshrl.u32 %v1190, 7
        %v1192 = vsub.s32 6, %v1191
        %v1193 = vrot.slane %v1164, %v1192
        %v1194 = vlaneseq
        %v1195 = vshrl.u32 %v1194, 7
        %v1196 = vsub.s32 7, %v1195
        %v1197 = vrot.slane %v1164, %v1196
        %v1206 = vsel %vm209, %v1169, 0.0
        %v1207 = vsel %vm209, %v1173, 0.0
        %v1208 = vadd.f32 %v1206, %v1207
        %v1209 = vsel %vm209, %v1177, 0.0
        %v1210 = vadd.f32 %v1208, %v1209
        %v1211 = vsel %vm209, %v1181, 0.0
        %v1212 = vadd.f32 %v1210, %v1211
        %v1213 = vsel %vm209, %v1185, 0.0
        %v1214 = vadd.f32 %v1212, %v1213
        %v1215 = vsel %vm209, %v1189, 0.0
        %v1216 = vadd.f32 %v1214, %v1215
        %v1217 = vsel %vm209, %v1193, 0.0
        %v1218 = vadd.f32 %v1216, %v1217
        %v1219 = vsel %vm209, %v1197, 0.0
        %v1220 = vadd.f32 %v1218, %v1219
        %1221 = vadd.xlane.f32.xlu0 %v1220
        %v1222 = vpop.xlane.xlu0 %1221
        %v1224 = vlaneseq
        %v1225 = vshrl.u32 %v1224, 7
        %v1226 = vsub.s32 0, %v1225
        %v1227 = vrot.slane %v1222, %v1226
        %v1229 = vrcp.pop %v1227
        %v1230 = vmul.f32 %v1164, %v1229
        %1231 = vst [vmem:[%s161] sm:$0xff] %v1230
        %s1232 = sand.u32 %s93, 1
        %s1233 = scalar_lea.sflag [#allocation3], %s1232
        %s1234 = sand.u32 %s93, 1
        %s1235 = smul.addr %s1234, 8
        %s1236 = scalar_lea.vmem [#allocation2], %s1235
        // Predicated region
        $region33: #{tpu_custom_call.1} parent=31 // pred_check
          %p1237 = pneg %p103
        $region34: #{tpu_custom_call.1} parent=31 // pred_check_branch
          %1239 = sbr.rel (%p1237) target = $region36
        $region35: #{tpu_custom_call.1} parent=31 // pred_region
          %s1241 = ssub.s32 128, 128
          %1242 = vsyncadd %s1233, %s1241
          %s1243 = smul.addr %s17, 8
          %s1244 = smul.addr %s1243, 16
          %s1245 = scalar_lea.hbm %s3, %s1244
          %s1247 = sshll.u32 %s1236, 4
          %s1248 = int_to_ptr.vmem [resolvable:$true] %s1247
          %1250 = dma.vmem_to_hbm [thread:$0]  %s1248, 128, %s1245, %s1233
        $region36: #{tpu_custom_call.1} parent=31 // pred_fallthru
          _
      $region32: #{tpu_custom_call.1} parent=5 // pred_fallthru
        _
      %p1251 = scmp.le.s32.totalorder 2, %s12
      // Predicated region
      $region37: #{tpu_custom_call.1} parent=5 // pred_check
        %p1252 = pneg %p1251
      $region38: #{tpu_custom_call.1} parent=5 // pred_check_branch
        %1254 = sbr.rel (%p1252) target = $region40
      $region39: #{tpu_custom_call.1} parent=5 // pred_region
        %s1255 = ssub.s32 %s12, 2
        // Predicated region
        $region41: #{tpu_custom_call.1} parent=39 // pred_check
          %p1256 = pneg %p109
        $region42: #{tpu_custom_call.1} parent=39 // pred_check_branch
          %1258 = sbr.rel (%p1256) target = $region44
        $region43: #{tpu_custom_call.1} parent=39 // pred_region
          %s1259 = sand.u32 %s94, 1
          %s1260 = scalar_lea.sflag [#allocation3], %s1259
          %s1261 = sand.u32 %s94, 1
          %s1262 = smul.addr %s1261, 8
          %s1263 = scalar_lea.vmem [#allocation2], %s1262
          %1264 = dma.done %s1260, 128
        $region44: #{tpu_custom_call.1} parent=39 // pred_fallthru
          _
      $region40: #{tpu_custom_call.1} parent=5 // pred_fallthru
        _
    $region6: #{tpu_custom_call.1} parent=1 // loop_footer
      %s16 = sadd.s32 1, %s12
    $region7: #{tpu_custom_call.1} parent=1 // loop_footer_branch
      %11 = sbr.rel target = $region3
    $region8: #{tpu_custom_call.1} parent=1 // loop_exit
      _
    %1265 = vsyncpa [#allocation3], 1
    %s1266 = scalar_lea.sflag [#allocation3], 1
    %1267 = vsyncpa %s1266, 1

</llo_original>
